<compile_context>
chip_gen: v5e
topology: v5e:2x2
jax: 0.10.0
libtpu: 0.0.40
codegen_flags: <defaults>
</compile_context>

<pallas_src>
import jax
import jax.numpy as jnp
from jax.experimental import pallas as pl
from jax.experimental.pallas import tpu as pltpu


def _round_up(x, m):
    return ((x + m - 1) // m) * m


def _mlp_kernel(x_ref, w1_ref, b1_ref, w2_ref, b2_ref, w3_ref, b3_ref, o_ref):
    cdt = w1_ref.dtype
    # Cast x to the compute dtype in-kernel: free VPU work hidden under DMA,
    # avoids a wrapper-side pad/cast copy of x in HBM.
    x = x_ref[...].astype(cdt)
    # Layer 1: Linear(N -> C) + ReLU  (f32 accumulation, f32 bias/ReLU)
    h1 = jnp.dot(x, w1_ref[...], preferred_element_type=jnp.float32)
    h1 = jnp.maximum(h1 + b1_ref[...], 0.0)
    # TODO(synk): Dropout omitted (identity in eval/inference mode).
    # Layer 2: Linear(C -> mid) + ReLU
    h2 = jnp.dot(h1.astype(cdt), w2_ref[...], preferred_element_type=jnp.float32)
    h2 = jnp.maximum(h2 + b2_ref[...], 0.0)
    # Layer 3: Linear(mid -> num_feats)
    out = jnp.dot(h2.astype(cdt), w3_ref[...], preferred_element_type=jnp.float32)
    o_ref[...] = (out + b3_ref[...]).astype(o_ref.dtype)


def prepare_params(params, compute_dtype=jnp.float32):
    """Pad internal dims (C, mid) to lane multiples and cast weights ONCE.

    Call this outside the per-step hot path. N (input features) and
    num_feats (output features) are deliberately NOT padded -- the kernel
    uses full-extent blocks for them, so no extra HBM bytes are moved.
    Biases stay f32: bias-add / ReLU run on the f32 accumulator (v5e has no
    bf16 VPU; on v6e/v7x the f32 VPU work hides under the MXU/DMA anyway).
    compute_dtype=jnp.bfloat16 is recommended on all generations (halves
    weight DMA bytes; MXU is bf16-native).
    """
    w1, b1, w2, b2, w3, b3 = (params["w1"], params["b1"], params["w2"],
                              params["b2"], params["w3"], params["b3"])
    N, C = w1.shape
    mid = w2.shape[1]
    F = w3.shape[1]
    Cp, Mp = _round_up(C, 128), _round_up(mid, 128)

    def pad2(a, rows, cols, dtype):
        return jnp.pad(a, ((0, rows - a.shape[0]),
                           (0, cols - a.shape[1]))).astype(dtype)

    return dict(
        w1=pad2(w1, N, Cp, compute_dtype),
        b1=pad2(b1, 1, Cp, jnp.float32),
        w2=pad2(w2, Cp, Mp, compute_dtype),
        b2=pad2(b2, 1, Mp, jnp.float32),
        w3=pad2(w3, Mp, F, compute_dtype),
        b3=b3.astype(jnp.float32),
    )


def video_decoder_forward(x, params, *, tb_max=4096, min_steps=2,
                          vmem_budget_bytes=36 << 20):
    """Fused VideoDecoder MLP forward.

    x: (B, N). params: dict from prepare_params() (raw (in, out) weights also
    work, just without the lane-dense internal padding).

    vmem_budget_bytes: tile/weight VMEM budget. Default (36 MiB) is safe on
    v5e/v6e/v7x; raise to ~96 MiB on v6e (128 MiB physical VMEM) for larger
    batch tiles. min_steps>=2 keeps the batch grid shardable across v7x's two
    TensorCores via dimension_semantics=("parallel",).
    """
    w1, b1, w2, b2, w3, b3 = (params["w1"], params["b1"], params["w2"],
                              params["b2"], params["w3"], params["b3"])
    B, N = x.shape
    assert w1.shape[0] == N, (w1.shape, N)
    Cp, Mp, F = w1.shape[1], w2.shape[1], w3.shape[1]
    out_dtype = x.dtype
    x_isz = jnp.dtype(x.dtype).itemsize
    o_isz = jnp.dtype(out_dtype).itemsize

    # Sublane multiple for the batch-tiled blocks: 8 (f32), 16 (bf16), 32 (8b).
    sub = max(32 // x_isz, 32 // o_isz)

    # --- VMEM accounting --------------------------------------------------
    # Weights/biases are counted double-buffered (constant index_map only
    # fetches them once, but the pipeline may still hold 2 buffers;
    # pipeline_mode=pl.Buffered(1) on the resident specs would halve this).
    weight_bytes = sum(int(a.nbytes) for a in (w1, b1, w2, b2, w3, b3))
    per_row = (2 * N * x_isz            # double-buffered input tile
               + 2 * F * o_isz          # double-buffered output tile
               + (Cp + Mp + F) * 4)     # f32 intermediates h1 / h2 / out
    tile_budget = max(vmem_budget_bytes - 2 * weight_bytes, per_row * sub)
    tb_cap = max(sub, min(tb_max, (tile_budget // per_row) // sub * sub))

    # --- balanced batch tile: >= min_steps grid steps, minimal edge waste ---
    steps = max(min_steps, pl.cdiv(B, tb_cap))
    tb = max(sub, min(tb_cap, _round_up(pl.cdiv(B, steps), sub)))
    steps = pl.cdiv(B, tb)              # last block is clipped, not padded

    # Constant block index -> weights/biases fetched once, VMEM-resident
    # across all grid steps.
    resident = lambda shape: pl.BlockSpec(shape, lambda i: (0, 0))

    vmem_limit = int(min(
        max(vmem_budget_bytes, 2 * weight_bytes + tb * per_row) + (8 << 20),
        120 << 20))

    return pl.pallas_call(
        _mlp_kernel,
        out_shape=jax.ShapeDtypeStruct((B, F), out_dtype),
        grid=(steps,),
        in_specs=[
            pl.BlockSpec((tb, N), lambda i: (i, 0)),   # x: true N, no pad/copy
            resident((N, Cp)), resident((1, Cp)),
            resident((Cp, Mp)), resident((1, Mp)),
            resident((Mp, F)), resident((1, F)),
        ],
        out_specs=pl.BlockSpec((tb, F), lambda i: (i, 0)),  # true F, no pad
        compiler_params=pltpu.CompilerParams(
            dimension_semantics=("parallel",),
            vmem_limit_bytes=vmem_limit),
    )(x, w1, b1, w2, b2, w3, b3)


def init_params(key, N, C, num_feats):
    mid = int((num_feats + C) / 2)
    ks = jax.random.split(key, 6)

    def linear(kw, kb, fan_in, fan_out):
        # PyTorch nn.Linear default init: U(-1/sqrt(fan_in), 1/sqrt(fan_in))
        bound = 1.0 / jnp.sqrt(fan_in)
        w = jax.random.uniform(kw, (fan_in, fan_out), jnp.float32, -bound, bound)
        b = jax.random.uniform(kb, (1, fan_out), jnp.float32, -bound, bound)
        return w, b

    w1, b1 = linear(ks[0], ks[1], N, C)
    w2, b2 = linear(ks[2], ks[3], C, mid)
    w3, b3 = linear(ks[4], ks[5], mid, num_feats)
    return dict(w1=w1, b1=b1, w2=w2, b2=b2, w3=w3, b3=b3)


def reference_forward(x, params):
    h1 = jnp.maximum(x @ params["w1"] + params["b1"], 0.0)
    h2 = jnp.maximum(h1 @ params["w2"] + params["b2"], 0.0)
    return h2 @ params["w3"] + params["b3"]


if __name__ == "__main__":
    # Small shapes consistent with the module: inp is (B, N).
    B, N, C, num_feats = 16, 16, 32, 64
    drop_out = 0.1  # unused at inference

    key = jax.random.PRNGKey(0)
    k_x, k_p = jax.random.split(key)
    x = jax.random.normal(k_x, (B, N), dtype=jnp.float32)
    raw = init_params(k_p, N, C, num_feats)
    ref = reference_forward(x, raw)

    # f32 path: exact (to fp tolerance) match against the reference.
    p32 = prepare_params(raw, jnp.float32)
    out = jax.block_until_ready(video_decoder_forward(x, p32))
    assert out.shape == (B, num_feats), out.shape
    assert jnp.allclose(out, ref, atol=1e-5, rtol=1e-5), "f32 mismatch vs reference"

    # Uneven batch (exercises the clipped last block -- no wrapper-side pad/slice).
    Bu = 13
    out_u = jax.block_until_ready(video_decoder_forward(x[:Bu], p32))
    assert out_u.shape == (Bu, num_feats), out_u.shape
    assert jnp.allclose(out_u, ref[:Bu], atol=1e-5, rtol=1e-5), "uneven-batch mismatch"

    # bf16 compute path (recommended on v5e/v6e/v7x): f32 accumulation, loose tol.
    pbf = prepare_params(raw, jnp.bfloat16)
    out_bf = jax.block_until_ready(video_decoder_forward(x, pbf))
    assert out_bf.shape == (B, num_feats), out_bf.shape
    assert jnp.allclose(out_bf, ref, atol=1e-1, rtol=1e-1), "bf16 path diverged"

    print("KERNEL_OK")
</pallas_src>

<mosaic_0001>
module attributes {stable_mosaic.version = 11 : i64} {
  func.func @_mlp_kernel(%arg0: i32, %arg1: memref<8x16xf32, #tpu.memory_space<vmem>>, %arg2: memref<16x128xf32, #tpu.memory_space<vmem>>, %arg3: memref<1x128xf32, #tpu.memory_space<vmem>>, %arg4: memref<128x128xf32, #tpu.memory_space<vmem>>, %arg5: memref<1x128xf32, #tpu.memory_space<vmem>>, %arg6: memref<128x64xf32, #tpu.memory_space<vmem>>, %arg7: memref<1x64xf32, #tpu.memory_space<vmem>>, %arg8: memref<8x64xf32, #tpu.memory_space<vmem>>) attributes {dimension_semantics = [#tpu.dimension_semantics<parallel>], iteration_bounds = array<i64: 2>, scalar_prefetch = 0 : i64, scratch_operands = 0 : i64, tpu.core_type = #tpu.core_type<tc>, window_params = [{transform_indices = @transform_0, window_bounds = array<i64: 8, 16>}, {pipeline_mode = #tpu.pipeline_mode<synchronous>, transform_indices = @transform_1, window_bounds = array<i64: 16, 128>}, {pipeline_mode = #tpu.pipeline_mode<synchronous>, transform_indices = @transform_2, window_bounds = array<i64: 1, 128>}, {pipeline_mode = #tpu.pipeline_mode<synchronous>, transform_indices = @transform_3, window_bounds = array<i64: 128, 128>}, {pipeline_mode = #tpu.pipeline_mode<synchronous>, transform_indices = @transform_4, window_bounds = array<i64: 1, 128>}, {pipeline_mode = #tpu.pipeline_mode<synchronous>, transform_indices = @transform_5, window_bounds = array<i64: 128, 64>}, {pipeline_mode = #tpu.pipeline_mode<synchronous>, transform_indices = @transform_6, window_bounds = array<i64: 1, 64>}, {transform_indices = @transform_7, window_bounds = array<i64: 8, 64>}]} {
    %c0 = arith.constant 0 : index
    %c0_0 = arith.constant 0 : index
    %0 = vector.load %arg1[%c0, %c0_0] : memref<8x16xf32, #tpu.memory_space<vmem>>, vector<8x16xf32>
    %c0_1 = arith.constant 0 : index
    %c0_2 = arith.constant 0 : index
    %1 = vector.load %arg2[%c0_1, %c0_2] : memref<16x128xf32, #tpu.memory_space<vmem>>, vector<16x128xf32>
    %cst = arith.constant dense<0.000000e+00> : vector<8x128xf32>
    %2 = tpu.matmul %0, %1, %cst {dimension_numbers = #tpu.dot_dimension_numbers<[1], [0], [0], [1], [0, 0, 1, 1], [], []>} : vector<8x16xf32>, vector<16x128xf32>, vector<8x128xf32> -> vector<8x128xf32>
    %c0_3 = arith.constant 0 : index
    %c0_4 = arith.constant 0 : index
    %3 = vector.load %arg3[%c0_3, %c0_4] : memref<1x128xf32, #tpu.memory_space<vmem>>, vector<1x128xf32>
    %4 = vector.broadcast %3 : vector<1x128xf32> to vector<8x128xf32>
    %5 = arith.addf %2, %4 : vector<8x128xf32>
    %cst_5 = arith.constant 0.000000e+00 : f32
    %6 = vector.broadcast %cst_5 : f32 to vector<8x128xf32>
    %7 = arith.maximumf %5, %6 : vector<8x128xf32>
    %c0_6 = arith.constant 0 : index
    %c0_7 = arith.constant 0 : index
    %8 = vector.load %arg4[%c0_6, %c0_7] : memref<128x128xf32, #tpu.memory_space<vmem>>, vector<128x128xf32>
    %cst_8 = arith.constant dense<0.000000e+00> : vector<8x128xf32>
    %9 = tpu.matmul %7, %8, %cst_8 {dimension_numbers = #tpu.dot_dimension_numbers<[1], [0], [0], [1], [0, 0, 1, 1], [], []>} : vector<8x128xf32>, vector<128x128xf32>, vector<8x128xf32> -> vector<8x128xf32>
    %c0_9 = arith.constant 0 : index
    %c0_10 = arith.constant 0 : index
    %10 = vector.load %arg5[%c0_9, %c0_10] : memref<1x128xf32, #tpu.memory_space<vmem>>, vector<1x128xf32>
    %11 = vector.broadcast %10 : vector<1x128xf32> to vector<8x128xf32>
    %12 = arith.addf %9, %11 : vector<8x128xf32>
    %cst_11 = arith.constant 0.000000e+00 : f32
    %13 = vector.broadcast %cst_11 : f32 to vector<8x128xf32>
    %14 = arith.maximumf %12, %13 : vector<8x128xf32>
    %c0_12 = arith.constant 0 : index
    %c0_13 = arith.constant 0 : index
    %15 = vector.load %arg6[%c0_12, %c0_13] : memref<128x64xf32, #tpu.memory_space<vmem>>, vector<128x64xf32>
    %cst_14 = arith.constant dense<0.000000e+00> : vector<8x64xf32>
    %16 = tpu.matmul %14, %15, %cst_14 {dimension_numbers = #tpu.dot_dimension_numbers<[1], [0], [0], [1], [0, 0, 1, 1], [], []>} : vector<8x128xf32>, vector<128x64xf32>, vector<8x64xf32> -> vector<8x64xf32>
    %c0_15 = arith.constant 0 : index
    %c0_16 = arith.constant 0 : index
    %17 = vector.load %arg7[%c0_15, %c0_16] : memref<1x64xf32, #tpu.memory_space<vmem>>, vector<1x64xf32>
    %18 = vector.broadcast %17 : vector<1x64xf32> to vector<8x64xf32>
    %19 = arith.addf %16, %18 : vector<8x64xf32>
    %c0_17 = arith.constant 0 : index
    %c0_18 = arith.constant 0 : index
    %20 = vector.load %arg8[%c0_17, %c0_18] : memref<8x64xf32, #tpu.memory_space<vmem>>, vector<8x64xf32>
    tpu.vector_store %arg8[%c0_17, %c0_18], %19 {strides = array<i32>} : memref<8x64xf32, #tpu.memory_space<vmem>>, vector<8x64xf32>,
    return
  }
  func.func @transform_0(%arg0: i32) -> (i32, i32) {
    %c0_i32 = arith.constant 0 : i32
    %c0_i32_0 = arith.constant 0 : i32
    return %arg0, %c0_i32 : i32, i32
  }
  func.func @transform_1(%arg0: i32) -> (i32, i32) {
    %c0_i32 = arith.constant 0 : i32
    %c0_i32_0 = arith.constant 0 : i32
    %c0_i32_1 = arith.constant 0 : i32
    return %c0_i32, %c0_i32_0 : i32, i32
  }
  func.func @transform_2(%arg0: i32) -> (i32, i32) {
    %c0_i32 = arith.constant 0 : i32
    %c0_i32_0 = arith.constant 0 : i32
    %c0_i32_1 = arith.constant 0 : i32
    return %c0_i32, %c0_i32_0 : i32, i32
  }
  func.func @transform_3(%arg0: i32) -> (i32, i32) {
    %c0_i32 = arith.constant 0 : i32
    %c0_i32_0 = arith.constant 0 : i32
    %c0_i32_1 = arith.constant 0 : i32
    return %c0_i32, %c0_i32_0 : i32, i32
  }
  func.func @transform_4(%arg0: i32) -> (i32, i32) {
    %c0_i32 = arith.constant 0 : i32
    %c0_i32_0 = arith.constant 0 : i32
    %c0_i32_1 = arith.constant 0 : i32
    return %c0_i32, %c0_i32_0 : i32, i32
  }
  func.func @transform_5(%arg0: i32) -> (i32, i32) {
    %c0_i32 = arith.constant 0 : i32
    %c0_i32_0 = arith.constant 0 : i32
    %c0_i32_1 = arith.constant 0 : i32
    return %c0_i32, %c0_i32_0 : i32, i32
  }
  func.func @transform_6(%arg0: i32) -> (i32, i32) {
    %c0_i32 = arith.constant 0 : i32
    %c0_i32_0 = arith.constant 0 : i32
    %c0_i32_1 = arith.constant 0 : i32
    return %c0_i32, %c0_i32_0 : i32, i32
  }
  func.func @transform_7(%arg0: i32) -> (i32, i32) {
    %c0_i32 = arith.constant 0 : i32
    %c0_i32_0 = arith.constant 0 : i32
    return %arg0, %c0_i32 : i32, i32
  }
}

</mosaic_0001>

<llo_original>
// kernel: tpu_custom_call.1
$region0: #{tpu_custom_call.1}
  #allocation0 [shape = 'u32[]', space=smem, size = 0x4, offset = 0x4, fixed_abs, tag = 'smem constant byte address 0x4 - core index']
  #allocation1 [shape = 'u32[72,128]{1,0:T(1,128)}', space=vmem, size = 0x9000, scoped, tag = 'internal scratch']
  %s0 = inlined_call_operand.vmem [shape: f32[16,16], index: 0, kind: input, shape index: {}]
  %s1 = inlined_call_operand.vmem [shape: f32[16,128], index: 1, kind: input, shape index: {}]
  %s2 = inlined_call_operand.vmem [shape: f32[1,128], index: 2, kind: input, shape index: {}]
  %s3 = inlined_call_operand.vmem [shape: f32[128,128], index: 3, kind: input, shape index: {}]
  %s4 = inlined_call_operand.vmem [shape: f32[1,128], index: 4, kind: input, shape index: {}]
  %s5 = inlined_call_operand.vmem [shape: f32[128,64], index: 5, kind: input, shape index: {}]
  %s6 = inlined_call_operand.vmem [shape: f32[1,64], index: 6, kind: input, shape index: {}]
  %s7 = inlined_call_operand.hbm [shape: f32[16,64], index: 7, kind: output, shape index: {}]
  %s8 = sld [smem:[#allocation0]]
  $region61: #{tpu_custom_call.1} parent=0
    _
  %s10 = ssub.s32 1, %s8
  %s11 = scalar_select 0, %s10, %s8
  $region1: #{tpu_custom_call.1} parent=0
    #allocation2 [shape = 'u8[8192]{0}', space=vmem, size = 0x2000, scoped, tag = 'output window, operand 0']
    #allocation3 [shape = 's32[2]{0}', space=sflag, size = 0x8, scoped, tag = 'scoped memory for tpu_custom_call.1']
    %12 = vsyncpa [#allocation3], 0
    %s13 = scalar_lea.sflag [#allocation3], 1
    %14 = vsyncpa %s13, 0
    loop: start=0, step=1, limit=4
    $region2: #{tpu_custom_call.1} parent=1 // loop_pre_header
      _
    $region3: #{tpu_custom_call.1} parent=1 // loop_header
      %s16 = sphi 0, %s20
      %p17 = scmp.ge.s32.totalorder %s16, 4
      %s26 = sphi 0, %s28
      %s29 = sphi 0, %s26
      %s30 = sphi 0, %s29
      %s46 = sphi 0, %s30
      %s50 = sphi 0, %s50
      %s52 = sphi 0, %s50
      %s53 = sphi 0, %s52
      %s67 = sphi 0, %s53
      %s71 = sphi 0, %s71
      %s73 = sphi 0, %s71
      %s74 = sphi 0, %s73
      %s88 = sphi 0, %s74
      %s92 = sphi 0, %s92
      %s94 = sphi 0, %s92
      %s95 = sphi 0, %s94
      %s109 = sphi 0, %s95
      %s113 = sphi 0, %s113
      %s115 = sphi 0, %s113
      %s116 = sphi 0, %s115
      %s130 = sphi 0, %s116
      %s134 = sphi 0, %s134
      %s136 = sphi 0, %s134
      %s137 = sphi 0, %s136
      %s151 = sphi 0, %s137
      %s155 = sphi 0, %s155
      %s157 = sphi 0, %s155
      %s158 = sphi 0, %s157
      %s172 = sphi 0, %s158
      %s178 = sphi 0, %s180
      %s181 = sphi 0, %s178
      %s182 = sphi 0, %s181
      %s198 = sphi 0, %s182
    $region4: #{tpu_custom_call.1} parent=1 // loop_header_branch
      %19 = sbr.rel (%p17) target = $region8
    $region5: #{tpu_custom_call.1} parent=1 // loop_body
      %s21 = ssub.s32 %s16, 1
      %s22 = ssub.s32 %s16, 2
      %s23 = sadd.s32 %s16, 1
      %s24 = ssub.s32 %s16, %s23
      %p25 = scmp.eq.s32.totalorder %s24, 0
      %s27 = sadd.s32 %s26, 1
      %s28 = scalar_select %p25, %s26, %s27
      %p31 = pneg %p25
      %p32 = scmp.eq.s32.totalorder %s16, 1
      %p33 = por %p31, %p32
      %p34 = scmp.ne.s32.totalorder %s26, %s29
      %p35 = scmp.eq.s32.totalorder %s16, 0
      %p36 = por %p34, %p35
      %p37 = scmp.ne.s32.totalorder %s26, %s29
      %p38 = scmp.eq.s32.totalorder %s21, 1
      %p39 = por %p37, %p38
      %p40 = scmp.ne.s32.totalorder %s29, %s30
      %p41 = scmp.eq.s32.totalorder %s21, 0
      %p42 = por %p40, %p41
      %p43 = scmp.ne.s32.totalorder %s29, %s30
      %p44 = scmp.eq.s32.totalorder %s22, 1
      %p45 = por %p43, %p44
      %p47 = scmp.ne.s32.totalorder %s30, %s46
      %p48 = scmp.eq.s32.totalorder %s22, 0
      %p49 = por %p47, %p48
      %s51 = sadd.s32 %s50, 1
      %p54 = scmp.eq.s32.totalorder %s16, 1
      %p55 = scmp.ne.s32.totalorder %s50, %s52
      %p56 = scmp.eq.s32.totalorder %s16, 0
      %p57 = por %p55, %p56
      %p58 = scmp.ne.s32.totalorder %s50, %s52
      %p59 = scmp.eq.s32.totalorder %s21, 1
      %p60 = por %p58, %p59
      %p61 = scmp.ne.s32.totalorder %s52, %s53
      %p62 = scmp.eq.s32.totalorder %s21, 0
      %p63 = por %p61, %p62
      %p64 = scmp.ne.s32.totalorder %s52, %s53
      %p65 = scmp.eq.s32.totalorder %s22, 1
      %p66 = por %p64, %p65
      %p68 = scmp.ne.s32.totalorder %s53, %s67
      %p69 = scmp.eq.s32.totalorder %s22, 0
      %p70 = por %p68, %p69
      %s72 = sadd.s32 %s71, 1
      %p75 = scmp.eq.s32.totalorder %s16, 1
      %p76 = scmp.ne.s32.totalorder %s71, %s73
      %p77 = scmp.eq.s32.totalorder %s16, 0
      %p78 = por %p76, %p77
      %p79 = scmp.ne.s32.totalorder %s71, %s73
      %p80 = scmp.eq.s32.totalorder %s21, 1
      %p81 = por %p79, %p80
      %p82 = scmp.ne.s32.totalorder %s73, %s74
      %p83 = scmp.eq.s32.totalorder %s21, 0
      %p84 = por %p82, %p83
      %p85 = scmp.ne.s32.totalorder %s73, %s74
      %p86 = scmp.eq.s32.totalorder %s22, 1
      %p87 = por %p85, %p86
      %p89 = scmp.ne.s32.totalorder %s74, %s88
      %p90 = scmp.eq.s32.totalorder %s22, 0
      %p91 = por %p89, %p90
      %s93 = sadd.s32 %s92, 1
      %p96 = scmp.eq.s32.totalorder %s16, 1
      %p97 = scmp.ne.s32.totalorder %s92, %s94
      %p98 = scmp.eq.s32.totalorder %s16, 0
      %p99 = por %p97, %p98
      %p100 = scmp.ne.s32.totalorder %s92, %s94
      %p101 = scmp.eq.s32.totalorder %s21, 1
      %p102 = por %p100, %p101
      %p103 = scmp.ne.s32.totalorder %s94, %s95
      %p104 = scmp.eq.s32.totalorder %s21, 0
      %p105 = por %p103, %p104
      %p106 = scmp.ne.s32.totalorder %s94, %s95
      %p107 = scmp.eq.s32.totalorder %s22, 1
      %p108 = por %p106, %p107
      %p110 = scmp.ne.s32.totalorder %s95, %s109
      %p111 = scmp.eq.s32.totalorder %s22, 0
      %p112 = por %p110, %p111
      %s114 = sadd.s32 %s113, 1
      %p117 = scmp.eq.s32.totalorder %s16, 1
      %p118 = scmp.ne.s32.totalorder %s113, %s115
      %p119 = scmp.eq.s32.totalorder %s16, 0
      %p120 = por %p118, %p119
      %p121 = scmp.ne.s32.totalorder %s113, %s115
      %p122 = scmp.eq.s32.totalorder %s21, 1
      %p123 = por %p121, %p122
      %p124 = scmp.ne.s32.totalorder %s115, %s116
      %p125 = scmp.eq.s32.totalorder %s21, 0
      %p126 = por %p124, %p125
      %p127 = scmp.ne.s32.totalorder %s115, %s116
      %p128 = scmp.eq.s32.totalorder %s22, 1
      %p129 = por %p127, %p128
      %p131 = scmp.ne.s32.totalorder %s116, %s130
      %p132 = scmp.eq.s32.totalorder %s22, 0
      %p133 = por %p131, %p132
      %s135 = sadd.s32 %s134, 1
      %p138 = scmp.eq.s32.totalorder %s16, 1
      %p139 = scmp.ne.s32.totalorder %s134, %s136
      %p140 = scmp.eq.s32.totalorder %s16, 0
      %p141 = por %p139, %p140
      %p142 = scmp.ne.s32.totalorder %s134, %s136
      %p143 = scmp.eq.s32.totalorder %s21, 1
      %p144 = por %p142, %p143
      %p145 = scmp.ne.s32.totalorder %s136, %s137
      %p146 = scmp.eq.s32.totalorder %s21, 0
      %p147 = por %p145, %p146
      %p148 = scmp.ne.s32.totalorder %s136, %s137
      %p149 = scmp.eq.s32.totalorder %s22, 1
      %p150 = por %p148, %p149
      %p152 = scmp.ne.s32.totalorder %s137, %s151
      %p153 = scmp.eq.s32.totalorder %s22, 0
      %p154 = por %p152, %p153
      %s156 = sadd.s32 %s155, 1
      %p159 = scmp.eq.s32.totalorder %s16, 1
      %p160 = scmp.ne.s32.totalorder %s155, %s157
      %p161 = scmp.eq.s32.totalorder %s16, 0
      %p162 = por %p160, %p161
      %p163 = scmp.ne.s32.totalorder %s155, %s157
      %p164 = scmp.eq.s32.totalorder %s21, 1
      %p165 = por %p163, %p164
      %p166 = scmp.ne.s32.totalorder %s157, %s158
      %p167 = scmp.eq.s32.totalorder %s21, 0
      %p168 = por %p166, %p167
      %p169 = scmp.ne.s32.totalorder %s157, %s158
      %p170 = scmp.eq.s32.totalorder %s22, 1
      %p171 = por %p169, %p170
      %p173 = scmp.ne.s32.totalorder %s158, %s172
      %p174 = scmp.eq.s32.totalorder %s22, 0
      %p175 = por %p173, %p174
      %s176 = ssub.s32 %s16, %s23
      %p177 = scmp.eq.s32.totalorder %s176, 0
      %s179 = sadd.s32 %s178, 1
      %s180 = scalar_select %p177, %s178, %s179
      %p183 = pneg %p177
      %p184 = scmp.eq.s32.totalorder %s16, 1
      %p185 = por %p183, %p184
      %p186 = scmp.ne.s32.totalorder %s178, %s181
      %p187 = scmp.eq.s32.totalorder %s16, 0
      %p188 = por %p186, %p187
      %p189 = scmp.ne.s32.totalorder %s178, %s181
      %p190 = scmp.eq.s32.totalorder %s21, 1
      %p191 = por %p189, %p190
      %p192 = scmp.ne.s32.totalorder %s181, %s182
      %p193 = scmp.eq.s32.totalorder %s21, 0
      %p194 = por %p192, %p193
      %p195 = scmp.ne.s32.totalorder %s181, %s182
      %p196 = scmp.eq.s32.totalorder %s22, 1
      %p197 = por %p195, %p196
      %p199 = scmp.ne.s32.totalorder %s182, %s198
      %p200 = scmp.eq.s32.totalorder %s22, 0
      %p201 = por %p199, %p200
      %p202 = scmp.le.s32.totalorder 1, %s16
      %p203 = scmp.lt.s32.totalorder %s16, 3
      %p204 = pnand %p202, %p203
      %p205 = pneg %p204
      // Predicated region
      $region9: #{tpu_custom_call.1} parent=5 // pred_check
        _
      $region10: #{tpu_custom_call.1} parent=5 // pred_check_branch
        %207 = sbr.rel (%p204) target = $region12
      $region11: #{tpu_custom_call.1} parent=5 // pred_region
        %s208 = ssub.s32 %s16, 1
        // Predicated region
        $region13: #{tpu_custom_call.1} parent=11 // pred_check
          %p209 = pneg %p63
        $region14: #{tpu_custom_call.1} parent=11 // pred_check_branch
          %211 = sbr.rel (%p209) target = $region16
        $region15: #{tpu_custom_call.1} parent=11 // pred_region
          _
        $region16: #{tpu_custom_call.1} parent=11 // pred_fallthru
          _
        // Predicated region
        $region17: #{tpu_custom_call.1} parent=11 // pred_check
          %p212 = pneg %p84
        $region18: #{tpu_custom_call.1} parent=11 // pred_check_branch
          %214 = sbr.rel (%p212) target = $region20
        $region19: #{tpu_custom_call.1} parent=11 // pred_region
          _
        $region20: #{tpu_custom_call.1} parent=11 // pred_fallthru
          _
        // Predicated region
        $region21: #{tpu_custom_call.1} parent=11 // pred_check
          %p215 = pneg %p105
        $region22: #{tpu_custom_call.1} parent=11 // pred_check_branch
          %217 = sbr.rel (%p215) target = $region24
        $region23: #{tpu_custom_call.1} parent=11 // pred_region
          _
        $region24: #{tpu_custom_call.1} parent=11 // pred_fallthru
          _
        // Predicated region
        $region25: #{tpu_custom_call.1} parent=11 // pred_check
          %p218 = pneg %p126
        $region26: #{tpu_custom_call.1} parent=11 // pred_check_branch
          %220 = sbr.rel (%p218) target = $region28
        $region27: #{tpu_custom_call.1} parent=11 // pred_region
          _
        $region28: #{tpu_custom_call.1} parent=11 // pred_fallthru
          _
        // Predicated region
        $region29: #{tpu_custom_call.1} parent=11 // pred_check
          %p221 = pneg %p147
        $region30: #{tpu_custom_call.1} parent=11 // pred_check_branch
          %223 = sbr.rel (%p221) target = $region32
        $region31: #{tpu_custom_call.1} parent=11 // pred_region
          _
        $region32: #{tpu_custom_call.1} parent=11 // pred_fallthru
          _
        // Predicated region
        $region33: #{tpu_custom_call.1} parent=11 // pred_check
          %p224 = pneg %p168
        $region34: #{tpu_custom_call.1} parent=11 // pred_check_branch
          %226 = sbr.rel (%p224) target = $region36
        $region35: #{tpu_custom_call.1} parent=11 // pred_region
          _
        $region36: #{tpu_custom_call.1} parent=11 // pred_fallthru
          _
      $region12: #{tpu_custom_call.1} parent=5 // pred_fallthru
        _
      %p227 = scmp.lt.s32.totalorder %s16, 2
      // Predicated region
      $region37: #{tpu_custom_call.1} parent=5 // pred_check
        %p228 = pneg %p227
      $region38: #{tpu_custom_call.1} parent=5 // pred_check_branch
        %230 = sbr.rel (%p228) target = $region40
      $region39: #{tpu_custom_call.1} parent=5 // pred_region
        // Predicated region
        $region41: #{tpu_custom_call.1} parent=39 // pred_check
          %p231 = pneg %p36
        $region42: #{tpu_custom_call.1} parent=39 // pred_check_branch
          %233 = sbr.rel (%p231) target = $region44
        $region43: #{tpu_custom_call.1} parent=39 // pred_region
          %p234 = scmp.lt.s32.totalorder %s16, 1
          %s235 = scalar_select %p234, %s16, 1
          %s236 = smul.addr %s235, 8
          %s237 = scalar_lea.vmem %s0, %s236
        $region44: #{tpu_custom_call.1} parent=39 // pred_fallthru
          _
      $region40: #{tpu_custom_call.1} parent=5 // pred_fallthru
        _
      %p238 = scmp.le.s32.totalorder 1, %s16
      %p239 = scmp.lt.s32.totalorder %s16, 3
      %p240 = pnand %p238, %p239
      %p241 = pneg %p240
      // Predicated region
      $region45: #{tpu_custom_call.1} parent=5 // pred_check
        _
      $region46: #{tpu_custom_call.1} parent=5 // pred_check_branch
        %243 = sbr.rel (%p240) target = $region48
      $region47: #{tpu_custom_call.1} parent=5 // pred_region
        %s244 = ssub.s32 %s16, 1
        %p245 = scmp.lt.s32.totalorder %s21, 1
        %s246 = scalar_select %p245, %s21, 1
        %s247 = smul.addr %s246, 8
        %s248 = scalar_lea.vmem %s0, %s247
        %p249 = pneg %p42
        %p250 = pneg %p39
        %p251 = pneg %p63
        %p252 = pneg %p60
        %p253 = pneg %p84
        %p254 = pneg %p81
        %p255 = pneg %p105
        %p256 = pneg %p102
        %p257 = pneg %p126
        %p258 = pneg %p123
        %p259 = pneg %p147
        %p260 = pneg %p144
        %p261 = pneg %p168
        %p262 = pneg %p165
        %p263 = pneg %p194
        %p264 = pneg %p191
        %s265 = sand.u32 %s181, 1
        %s266 = scalar_lea.sflag [#allocation3], %s265
        %s267 = sand.u32 %s181, 1
        %s268 = smul.addr %s267, 8
        %s269 = scalar_lea.vmem [#allocation2], %s268
        %p270 = scmp.lt.s32.totalorder %s21, 1
        %s271 = scalar_select %p270, %s21, 1
        %s272 = smul.addr %s271, 8
        %s273 = scalar_lea.vmem %s0, %s272
        %v274 = vld [vmem:[%s273] sm:$0xff]
        %v275 = vld [vmem:[%s1] sm:$0xff]
        %v276 = vld [vmem:[%s1 + $0x8] sm:$0xff]
        %v277 = vld [vmem:[%s2] sm:$0x1]
        %v279 = vperm.slane %v277, 0
        %vm281 = vcmask 130048
        %v283 = vsel %vm281, %v274, 0
        %285 = vmatpush.msra.mxu0 0.0
        %286 = vmatpush.msra.mxu0 0.0
        %287 = vmatpush.msra.mxu0 0.0
        %288 = vmatpush.msra.mxu0 0.0
        %289 = vmatpush.msra.mxu0 0.0
        %290 = vmatpush.msra.mxu0 0.0
        %291 = vmatpush.msra.mxu0 0.0
        %292 = vmatpush.msra.mxu0 0.0
        %293 = vmatpush.msra.mxu0 0.0
        %294 = vmatpush.msra.mxu0 0.0
        %295 = vmatpush.msra.mxu0 0.0
        %296 = vmatpush.msra.mxu0 0.0
        %297 = vmatpush.msra.mxu0 0.0
        %298 = vmatpush.msra.mxu0 0.0
        %299 = vmatpush.msra.mxu0 %v276
        %300 = vmatpush.msra.mxu0 %v275
        %301 = vmatmul.f32.gmra.mxu0 %v283
        %v302 = vpop.f32.mrf.mxu0
        %v303 = vadd.f32 %v279, %v302
        %304 = vdwg.mxu0
        %v305 = vmax.f32 %v303, 0.0
        %v306 = vld [vmem:[%s3] sm:$0xff]
        %v307 = vld [vmem:[%s3 + $0x8] sm:$0xff]
        %v308 = vld [vmem:[%s3 + $0x10] sm:$0xff]
        %v309 = vld [vmem:[%s3 + $0x18] sm:$0xff]
        %v310 = vld [vmem:[%s3 + $0x20] sm:$0xff]
        %v311 = vld [vmem:[%s3 + $0x28] sm:$0xff]
        %v312 = vld [vmem:[%s3 + $0x30] sm:$0xff]
        %v313 = vld [vmem:[%s3 + $0x38] sm:$0xff]
        %v314 = vld [vmem:[%s3 + $0x40] sm:$0xff]
        %v315 = vld [vmem:[%s3 + $0x48] sm:$0xff]
        %v316 = vld [vmem:[%s3 + $0x50] sm:$0xff]
        %v317 = vld [vmem:[%s3 + $0x58] sm:$0xff]
        %v318 = vld [vmem:[%s3 + $0x60] sm:$0xff]
        %v319 = vld [vmem:[%s3 + $0x68] sm:$0xff]
        %v320 = vld [vmem:[%s3 + $0x70] sm:$0xff]
        %v321 = vld [vmem:[%s3 + $0x78] sm:$0xff]
        %v322 = vld [vmem:[%s4] sm:$0x1]
        %v324 = vperm.slane %v322, 0
        %326 = vmatpush.msra.mxu0 %v321
        %327 = vmatpush.msra.mxu0 %v320
        %328 = vmatpush.msra.mxu0 %v319
        %329 = vmatpush.msra.mxu0 %v318
        %330 = vmatpush.msra.mxu0 %v317
        %331 = vmatpush.msra.mxu0 %v316
        %332 = vmatpush.msra.mxu0 %v315
        %333 = vmatpush.msra.mxu0 %v314
        %334 = vmatpush.msra.mxu0 %v313
        %335 = vmatpush.msra.mxu0 %v312
        %336 = vmatpush.msra.mxu0 %v311
        %337 = vmatpush.msra.mxu0 %v310
        %338 = vmatpush.msra.mxu0 %v309
        %339 = vmatpush.msra.mxu0 %v308
        %340 = vmatpush.msra.mxu0 %v307
        %341 = vmatpush.msra.mxu0 %v306
        %342 = vmatmul.f32.gmra.mxu0 %v305
        %v343 = vpop.f32.mrf.mxu0
        %v344 = vadd.f32 %v324, %v343
        %345 = vdwg.mxu0
        %v346 = vmax.f32 %v344, 0.0
        %v347 = vld [vmem:[%s5] sm:$0xff]
        %v348 = vld [vmem:[%s5 + $0x8] sm:$0xff]
        %v349 = vld [vmem:[%s5 + $0x10] sm:$0xff]
        %v350 = vld [vmem:[%s5 + $0x18] sm:$0xff]
        %v351 = vld [vmem:[%s5 + $0x20] sm:$0xff]
        %v352 = vld [vmem:[%s5 + $0x28] sm:$0xff]
        %v353 = vld [vmem:[%s5 + $0x30] sm:$0xff]
        %v354 = vld [vmem:[%s5 + $0x38] sm:$0xff]
        %v355 = vld [vmem:[%s5 + $0x40] sm:$0xff]
        %v356 = vld [vmem:[%s5 + $0x48] sm:$0xff]
        %v357 = vld [vmem:[%s5 + $0x50] sm:$0xff]
        %v358 = vld [vmem:[%s5 + $0x58] sm:$0xff]
        %v359 = vld [vmem:[%s5 + $0x60] sm:$0xff]
        %v360 = vld [vmem:[%s5 + $0x68] sm:$0xff]
        %v361 = vld [vmem:[%s5 + $0x70] sm:$0xff]
        %v362 = vld [vmem:[%s5 + $0x78] sm:$0xff]
        %v363 = vld [vmem:[%s6] sm:$0x1]
        %v365 = vperm.slane %v363, 0
        %367 = vmatpush.msra.mxu0 %v362
        %368 = vmatpush.msra.mxu0 %v361
        %369 = vmatpush.msra.mxu0 %v360
        %370 = vmatpush.msra.mxu0 %v359
        %371 = vmatpush.msra.mxu0 %v358
        %372 = vmatpush.msra.mxu0 %v357
        %373 = vmatpush.msra.mxu0 %v356
        %374 = vmatpush.msra.mxu0 %v355
        %375 = vmatpush.msra.mxu0 %v354
        %376 = vmatpush.msra.mxu0 %v353
        %377 = vmatpush.msra.mxu0 %v352
        %378 = vmatpush.msra.mxu0 %v351
        %379 = vmatpush.msra.mxu0 %v350
        %380 = vmatpush.msra.mxu0 %v349
        %381 = vmatpush.msra.mxu0 %v348
        %382 = vmatpush.msra.mxu0 %v347
        %383 = vmatmul.f32.gmra.mxu0 %v346
        %v384 = vpop.f32.mrf.mxu0
        %v385 = vadd.f32 %v365, %v384
        %386 = vdwg.mxu0
        %vm387 = vcmask 523264
        %388 = vst.msk [vmem:[%s269] sm:$0xff] %vm387, %v385
        %s389 = sand.u32 %s181, 1
        %s390 = scalar_lea.sflag [#allocation3], %s389
        %s391 = sand.u32 %s181, 1
        %s392 = smul.addr %s391, 8
        %s393 = scalar_lea.vmem [#allocation2], %s392
        // Predicated region
        $region49: #{tpu_custom_call.1} parent=47 // pred_check
          %p394 = pneg %p191
        $region50: #{tpu_custom_call.1} parent=47 // pred_check_branch
          %396 = sbr.rel (%p394) target = $region52
        $region51: #{tpu_custom_call.1} parent=47 // pred_region
          %398 = vsyncadd %s390, 0
          %s399 = smul.addr %s21, 8
          %s400 = scalar_lea.hbm %s7, %s399
          %s402 = sshll.u32 %s393, 4
          %s403 = int_to_ptr.vmem [resolvable:$true] %s402
          %s404 = sshll.u32 %s400, 4
          %s405 = int_to_ptr.hbm [resolvable:$true] %s404
          %407 = dma.vmem_to_hbm [thread:$0]  %s403, 128, %s405, %s390
        $region52: #{tpu_custom_call.1} parent=47 // pred_fallthru
          _
      $region48: #{tpu_custom_call.1} parent=5 // pred_fallthru
        _
      %p408 = scmp.le.s32.totalorder 2, %s16
      // Predicated region
      $region53: #{tpu_custom_call.1} parent=5 // pred_check
        %p409 = pneg %p408
      $region54: #{tpu_custom_call.1} parent=5 // pred_check_branch
        %411 = sbr.rel (%p409) target = $region56
      $region55: #{tpu_custom_call.1} parent=5 // pred_region
        %s412 = ssub.s32 %s16, 2
        // Predicated region
        $region57: #{tpu_custom_call.1} parent=55 // pred_check
          %p413 = pneg %p197
        $region58: #{tpu_custom_call.1} parent=55 // pred_check_branch
          %415 = sbr.rel (%p413) target = $region60
        $region59: #{tpu_custom_call.1} parent=55 // pred_region
          %s416 = sand.u32 %s182, 1
          %s417 = scalar_lea.sflag [#allocation3], %s416
          %s418 = sand.u32 %s182, 1
          %s419 = smul.addr %s418, 8
          %s420 = scalar_lea.vmem [#allocation2], %s419
          %422 = dma.done %s417, 128
        $region60: #{tpu_custom_call.1} parent=55 // pred_fallthru
          _
      $region56: #{tpu_custom_call.1} parent=5 // pred_fallthru
        _
    $region6: #{tpu_custom_call.1} parent=1 // loop_footer
      %s20 = sadd.s32 1, %s16
    $region7: #{tpu_custom_call.1} parent=1 // loop_footer_branch
      %15 = sbr.rel target = $region3
    $region8: #{tpu_custom_call.1} parent=1 // loop_exit
      _
    %423 = vsyncpa [#allocation3], 1
    %s424 = scalar_lea.sflag [#allocation3], 1
    %425 = vsyncpa %s424, 1

</llo_original>
